<compile_context>
chip_gen: v7x
topology: tpu7x:2x2x1
jax: 0.10.0
libtpu: 0.0.40
codegen_flags: <defaults>
</compile_context>

<pallas_src>
import functools

import jax
import jax.numpy as jnp
from jax.experimental import pallas as pl
from jax.experimental.pallas import tpu as pltpu

EPS = 1e-5
_MIB = 1024 * 1024


def _ceil_div(a, b):
    return -(-a // b)


# ----------------------------------------------------------------------------
# Generation-aware budgets (v5e/v6e: 128 MiB VMEM; v7x: 64 MiB per TC).
# ----------------------------------------------------------------------------
def _budgets():
    cap = 128 * _MIB
    try:
        info = pltpu.get_tpu_info()
        cap = int(getattr(info, "vmem_capacity_bytes", cap) or cap)
    except Exception:
        pass  # unknown target / interpret mode: assume 128 MiB
    if cap <= 64 * _MIB:
        # v7x
        return dict(vmem_limit=48 * _MIB, fused_f32_bytes=6 * _MIB,
                    stats_block=16 * _MIB, apply_block=8 * _MIB)
    # v5e / v6e (v5e's scoped default is only 16 MiB, so set the limit).
    return dict(vmem_limit=96 * _MIB, fused_f32_bytes=16 * _MIB,
                stats_block=24 * _MIB, apply_block=12 * _MIB)


def _pick_lane_tile(row_bytes, hw, budget):
    """Largest lane tile tl (multiple of 128 when possible) with the
    (rows x tl) block under `budget` bytes.  Never exceeds the cap; a
    non-dividing tl produces a ragged last tile that is masked in the stats
    kernel and handled as a partial block in the apply pass."""
    if hw * row_bytes <= budget:
        return hw
    cap = max(128, (budget // row_bytes) // 128 * 128)
    if hw % 128 == 0:
        for t in range(min(cap, hw), 127, -128):
            if hw % t == 0:
                return t            # dividing tile -> no ragged tail
    return min(cap, hw)             # ragged tail (last block partial)


def _pick_channel_block(c, itemsize):
    """Split channels into 2 sublane-aligned blocks when possible so the stats
    pass's leading 'parallel' grid axis can occupy both v7x TensorCores."""
    align = max(8, 32 // max(1, itemsize))     # f32->8, bf16->16, int8->32
    if c % (2 * align) == 0:
        return c // 2
    return c


# ----------------------------------------------------------------------------
# Kernels.
# ----------------------------------------------------------------------------
def _bn_fused_kernel(x_ref, gamma_ref, beta_ref, o_ref, *, inv_count):
    # Whole (N, C, HW) branch resident in VMEM: one HBM read + one HBM write.
    x = x_ref[...].astype(jnp.float32)
    mean = jnp.sum(jnp.sum(x, axis=2, keepdims=True), axis=0) * inv_count  # (C,1)
    xc = x - mean
    var = jnp.sum(jnp.sum(xc * xc, axis=2, keepdims=True), axis=0) * inv_count
    inv = jax.lax.rsqrt(var + EPS)
    scale = gamma_ref[...].astype(jnp.float32) * inv
    shift = beta_ref[...].astype(jnp.float32) - mean * scale
    o_ref[...] = (x * scale + shift).astype(o_ref.dtype)


def _bn_stats_kernel(x_ref, gamma_ref, beta_ref, scale_ref, shift_ref,
                     k_ref, s_ref, q_ref, *, hw, tl, inv_count):
    # grid = (channel_blocks, lane_tiles); the inner lane axis is the reduction.
    l = pl.program_id(1)
    x = x_ref[...].astype(jnp.float32)
    n = x.shape[0]

    @pl.when(l == 0)
    def _():
        # Shift point k = mean of the first lane tile (always a full tile by
        # construction) -> numerically stable moments at zero extra traffic.
        k_ref[...] = (jnp.sum(jnp.sum(x, axis=2, keepdims=True), axis=0)
                      * (1.0 / (n * tl)))
        s_ref[...] = jnp.zeros_like(s_ref)
        q_ref[...] = jnp.zeros_like(q_ref)

    xc = x - k_ref[...]                      # (C,1) broadcasts over (N,C,tl)
    if hw % tl != 0:
        # Ragged last tile: zero padded lanes (jnp.where also kills any
        # NaN/Inf garbage the padded block region might contain).
        lane = jax.lax.broadcasted_iota(jnp.int32, xc.shape, 2)
        xc = jnp.where(l * tl + lane < hw, xc, 0.0)
    s_ref[...] += jnp.sum(jnp.sum(xc, axis=2, keepdims=True), axis=0)
    q_ref[...] += jnp.sum(jnp.sum(xc * xc, axis=2, keepdims=True), axis=0)

    @pl.when(l == pl.num_programs(1) - 1)
    def _():
        m = s_ref[...] * inv_count                                # E[x - k]
        var = jnp.maximum(q_ref[...] * inv_count - m * m, 0.0)    # biased var
        inv = jax.lax.rsqrt(var + EPS)
        scale = gamma_ref[...].astype(jnp.float32) * inv
        mean = m + k_ref[...]
        scale_ref[...] = scale
        shift_ref[...] = beta_ref[...].astype(jnp.float32) - mean * scale


def _bn_apply_kernel(x_ref, scale_ref, shift_ref, o_ref):
    # Single FMA per element: y = x * scale + shift.
    x = x_ref[...].astype(jnp.float32)
    o_ref[...] = (x * scale_ref[...] + shift_ref[...]).astype(o_ref.dtype)


# ----------------------------------------------------------------------------
# Per-branch dispatch.
# ----------------------------------------------------------------------------
def _bn_one_branch(x, gamma, beta, budgets):
    """Training-mode BatchNorm2d forward for one NCHW branch."""
    N, C, H, W = x.shape
    HW = H * W
    itemsize = jnp.dtype(x.dtype).itemsize
    x3 = x.reshape(N, C, HW)                  # free reshape, no transpose
    g = gamma.reshape(C, 1).astype(jnp.float32)
    b = beta.reshape(C, 1).astype(jnp.float32)
    inv_count = 1.0 / (N * HW)
    vmem_limit = budgets["vmem_limit"]

    # ---- Fused single-pass path: whole branch resident in VMEM (2x traffic).
    if N * C * HW * 4 <= budgets["fused_f32_bytes"]:
        # TODO(synk): callers that can donate x may add input_output_aliases={0: 0}
        # here to halve the branch's HBM footprint.
        y3 = pl.pallas_call(
            functools.partial(_bn_fused_kernel, inv_count=inv_count),
            out_shape=jax.ShapeDtypeStruct((N, C, HW), x.dtype),
            compiler_params=pltpu.CompilerParams(vmem_limit_bytes=vmem_limit),
        )(x3, g, b)
        return y3.reshape(N, C, H, W)

    # ---- Two-pass fallback for large branches (3x traffic, fully tiled). ----
    tc = _pick_channel_block(C, itemsize)
    n_cb = C // tc
    tl_s = _pick_lane_tile(N * tc * itemsize, HW, budgets["stats_block"])
    nl_s = _ceil_div(HW, tl_s)

    scale, shift = pl.pallas_call(
        functools.partial(_bn_stats_kernel, hw=HW, tl=tl_s, inv_count=inv_count),
        out_shape=(jax.ShapeDtypeStruct((C, 1), jnp.float32),
                   jax.ShapeDtypeStruct((C, 1), jnp.float32)),
        grid_spec=pltpu.PrefetchScalarGridSpec(
            num_scalar_prefetch=0,
            grid=(n_cb, nl_s),
            in_specs=[
                pl.BlockSpec((N, tc, tl_s), lambda cb, l: (0, cb, l)),
                pl.BlockSpec((tc, 1), lambda cb, l: (cb, 0)),
                pl.BlockSpec((tc, 1), lambda cb, l: (cb, 0)),
            ],
            out_specs=[
                pl.BlockSpec((tc, 1), lambda cb, l: (cb, 0)),
                pl.BlockSpec((tc, 1), lambda cb, l: (cb, 0)),
            ],
            scratch_shapes=[
                pltpu.VMEM((tc, 1), jnp.float32),   # k (shift point)
                pltpu.VMEM((tc, 1), jnp.float32),   # sum(x - k)
                pltpu.VMEM((tc, 1), jnp.float32),   # sum((x - k)^2)
            ],
        ),
        compiler_params=pltpu.CompilerParams(
            dimension_semantics=("parallel", "arbitrary"),
            vmem_limit_bytes=vmem_limit,
        ),
    )(x3, g, b)

    tl_a = _pick_lane_tile(N * C * itemsize, HW, budgets["apply_block"])
    nl_a = _ceil_div(HW, tl_a)

    y3 = pl.pallas_call(
        _bn_apply_kernel,
        out_shape=jax.ShapeDtypeStruct((N, C, HW), x.dtype),
        grid_spec=pltpu.PrefetchScalarGridSpec(
            num_scalar_prefetch=0,
            grid=(nl_a,),
            in_specs=[
                pl.BlockSpec((N, C, tl_a), lambda l: (0, 0, l)),
                pl.BlockSpec((C, 1), lambda l: (0, 0)),
                pl.BlockSpec((C, 1), lambda l: (0, 0)),
            ],
            out_specs=pl.BlockSpec((N, C, tl_a), lambda l: (0, 0, l)),
        ),
        compiler_params=pltpu.CompilerParams(
            dimension_semantics=("parallel",),
            vmem_limit_bytes=vmem_limit,
        ),
    )(x3, scale, shift)

    return y3.reshape(N, C, H, W)


# ----------------------------------------------------------------------------
# Public wrapper (jitted as a whole, not per branch).
# ----------------------------------------------------------------------------
@jax.jit
def _bn_parallel_jit(x_parallel, gammas, betas):
    budgets = _budgets()
    return [_bn_one_branch(x, gammas[p], betas[p], budgets)
            for p, x in enumerate(x_parallel)]


def batchnorm2d_parallel(x_parallel, gammas, betas):
    """x_parallel: list of P NCHW arrays (same C == num_features).
    gammas/betas: (P, C) per-branch affine parameters.

    TODO(synk): running_mean/running_var buffers are not tracked; only the
    training-mode forward output of the module is reproduced.
    """
    return _bn_parallel_jit(tuple(x_parallel), gammas, betas)


# ----------------------------------------------------------------------------
# Reference + self-test.
# ----------------------------------------------------------------------------
def _reference(x_parallel, gammas, betas):
    outs = []
    for p, x in enumerate(x_parallel):
        xf = x.astype(jnp.float32)
        mean = jnp.mean(xf, axis=(0, 2, 3), keepdims=True)
        var = jnp.mean((xf - mean) ** 2, axis=(0, 2, 3), keepdims=True)
        y = (xf - mean) * jax.lax.rsqrt(var + EPS)
        y = y * gammas[p][None, :, None, None] + betas[p][None, :, None, None]
        outs.append(y.astype(x.dtype))
    return outs


if __name__ == "__main__":
    key = jax.random.PRNGKey(0)
    num_parallel = 3
    N, C, H, W = 2, 4, 16, 16

    keys = jax.random.split(key, num_parallel)
    x_parallel = [
        jax.random.normal(k, (N, C, H, W), dtype=jnp.float32) * (i + 1.0) + i
        for i, k in enumerate(keys)
    ]

    # Deterministic BatchNorm2d parameter init (PyTorch defaults): weight=1, bias=0.
    gammas = jnp.ones((num_parallel, C), dtype=jnp.float32)
    betas = jnp.zeros((num_parallel, C), dtype=jnp.float32)

    outs = batchnorm2d_parallel(x_parallel, gammas, betas)
    outs = [jax.block_until_ready(o) for o in outs]

    refs = _reference(x_parallel, gammas, betas)
    for o, r in zip(outs, refs):
        assert o.shape == r.shape and o.dtype == r.dtype
        assert jnp.max(jnp.abs(o - r)) < 1e-4

    # Also exercise the large-tensor two-pass fallback (channel-block parallel
    # axis + ragged lane tail) by forcing tiny budgets on a small ragged input.
    small_budgets = dict(vmem_limit=32 * _MIB, fused_f32_bytes=0,
                         stats_block=8 * 1024, apply_block=8 * 1024)
    kf = jax.random.split(key, 2)[1]
    xf = jax.random.normal(kf, (2, 16, 18, 18), dtype=jnp.float32) * 2.0 + 1.0
    gf = jnp.linspace(0.5, 1.5, 16, dtype=jnp.float32)
    bf = jnp.linspace(-0.5, 0.5, 16, dtype=jnp.float32)
    yf = jax.block_until_ready(_bn_one_branch(xf, gf, bf, small_budgets))
    rf = _reference([xf], gf[None], bf[None])[0]
    assert yf.shape == rf.shape and jnp.max(jnp.abs(yf - rf)) < 1e-4

    print("KERNEL_OK")
</pallas_src>

<mosaic_0001>
module attributes {stable_mosaic.version = 11 : i64} {
  func.func @_bn_fused_kernel(%arg0: memref<2x4x256xf32, #tpu.memory_space<vmem>>, %arg1: memref<4x1xf32, #tpu.memory_space<vmem>>, %arg2: memref<4x1xf32, #tpu.memory_space<vmem>>, %arg3: memref<2x4x256xf32, #tpu.memory_space<vmem>>) attributes {dimension_semantics = [], scalar_prefetch = 0 : i64, scratch_operands = 0 : i64, tpu.core_type = #tpu.core_type<tc>} {
    %c0 = arith.constant 0 : index
    %c0_0 = arith.constant 0 : index
    %c0_1 = arith.constant 0 : index
    %0 = vector.load %arg0[%c0, %c0_0, %c0_1] : memref<2x4x256xf32, #tpu.memory_space<vmem>>, vector<2x4x256xf32>
    %cst = arith.constant dense<0.000000e+00> : vector<2x4xf32>
    %1 = vector.multi_reduction <add>, %0, %cst [2] : vector<2x4x256xf32> to vector<2x4xf32>
    %2 = vector.shape_cast %1 : vector<2x4xf32> to vector<2x4x1xf32>
    %cst_2 = arith.constant dense<0.000000e+00> : vector<4x1xf32>
    %3 = vector.multi_reduction <add>, %2, %cst_2 [0] : vector<2x4x1xf32> to vector<4x1xf32>
    %cst_3 = arith.constant 0.001953125 : f32
    %4 = vector.broadcast %cst_3 : f32 to vector<4x1xf32>
    %5 = arith.mulf %3, %4 : vector<4x1xf32>
    %6 = vector.shape_cast %5 : vector<4x1xf32> to vector<1x4x1xf32>
    %7 = vector.broadcast %6 : vector<1x4x1xf32> to vector<2x4x256xf32>
    %8 = arith.subf %0, %7 : vector<2x4x256xf32>
    %9 = arith.mulf %8, %8 : vector<2x4x256xf32>
    %cst_4 = arith.constant dense<0.000000e+00> : vector<2x4xf32>
    %10 = vector.multi_reduction <add>, %9, %cst_4 [2] : vector<2x4x256xf32> to vector<2x4xf32>
    %11 = vector.shape_cast %10 : vector<2x4xf32> to vector<2x4x1xf32>
    %cst_5 = arith.constant dense<0.000000e+00> : vector<4x1xf32>
    %12 = vector.multi_reduction <add>, %11, %cst_5 [0] : vector<2x4x1xf32> to vector<4x1xf32>
    %cst_6 = arith.constant 0.001953125 : f32
    %13 = vector.broadcast %cst_6 : f32 to vector<4x1xf32>
    %14 = arith.mulf %12, %13 : vector<4x1xf32>
    %cst_7 = arith.constant 9.99999974E-6 : f32
    %15 = vector.broadcast %cst_7 : f32 to vector<4x1xf32>
    %16 = arith.addf %14, %15 : vector<4x1xf32>
    %17 = math.rsqrt %16 : vector<4x1xf32>
    %c0_8 = arith.constant 0 : index
    %c0_9 = arith.constant 0 : index
    %18 = vector.load %arg1[%c0_8, %c0_9] : memref<4x1xf32, #tpu.memory_space<vmem>>, vector<4x1xf32>
    %19 = arith.mulf %18, %17 : vector<4x1xf32>
    %c0_10 = arith.constant 0 : index
    %c0_11 = arith.constant 0 : index
    %20 = vector.load %arg2[%c0_10, %c0_11] : memref<4x1xf32, #tpu.memory_space<vmem>>, vector<4x1xf32>
    %21 = arith.mulf %5, %19 : vector<4x1xf32>
    %22 = arith.subf %20, %21 : vector<4x1xf32>
    %23 = vector.shape_cast %19 : vector<4x1xf32> to vector<1x4x1xf32>
    %24 = vector.broadcast %23 : vector<1x4x1xf32> to vector<2x4x256xf32>
    %25 = arith.mulf %0, %24 : vector<2x4x256xf32>
    %26 = vector.shape_cast %22 : vector<4x1xf32> to vector<1x4x1xf32>
    %27 = vector.broadcast %26 : vector<1x4x1xf32> to vector<2x4x256xf32>
    %28 = arith.addf %25, %27 : vector<2x4x256xf32>
    %c0_12 = arith.constant 0 : index
    %c0_13 = arith.constant 0 : index
    %c0_14 = arith.constant 0 : index
    %29 = vector.load %arg3[%c0_12, %c0_13, %c0_14] : memref<2x4x256xf32, #tpu.memory_space<vmem>>, vector<2x4x256xf32>
    tpu.vector_store %arg3[%c0_12, %c0_13, %c0_14], %28 {strides = array<i32>} : memref<2x4x256xf32, #tpu.memory_space<vmem>>, vector<2x4x256xf32>,
    return
  }
}

</mosaic_0001>

<llo_original>
// kernel: _bn_parallel_jit.3
$region0: #{_bn_parallel_jit.3}
  #allocation0 [shape = 'u32[]', space=smem, size = 0x4, offset = 0x4, fixed_abs, tag = 'smem constant byte address 0x4 - core index']
  #allocation1 [shape = 'u32[144,128]{1,0:T(1,128)}', space=vmem, size = 0x12000, scoped, tag = 'internal scratch']
  %s0 = inlined_call_operand.hbm [shape: f32[2,4,256], index: 0, kind: input, shape index: {}]
  %s1 = inlined_call_operand.hbm [shape: f32[4,1], index: 1, kind: input, shape index: {}]
  %s2 = inlined_call_operand.hbm [shape: f32[4,1], index: 2, kind: input, shape index: {}]
  %s3 = inlined_call_operand.hbm [shape: f32[2,4,256], index: 3, kind: output, shape index: {}]
  %s4 = sld [smem:[#allocation0]]
  $region34: #{_bn_parallel_jit.3} parent=0
    _
  %s6 = ssub.s32 1, %s4
  %s7 = scalar_select 0, %s6, %s4
  $region1: #{_bn_parallel_jit.3} parent=0
    #allocation2 [shape = 'u8[8192]{0}', space=vmem, size = 0x2000, scoped, tag = 'input window, operand 0, single buffered']
    #allocation3 [shape = 's32[1]{0}', space=sflag, size = 0x4, scoped, tag = 'scoped memory for _bn_parallel_jit.3']
    #allocation4 [shape = 's32[1]{0}', space=sflag, size = 0x4, scoped, tag = 'scoped memory for _bn_parallel_jit.3']
    #allocation5 [shape = 'u8[2048]{0}', space=vmem, size = 0x800, scoped, tag = 'input window, operand 1, single buffered']
    #allocation6 [shape = 's32[1]{0}', space=sflag, size = 0x4, scoped, tag = 'scoped memory for _bn_parallel_jit.3']
    #allocation7 [shape = 'u8[2048]{0}', space=vmem, size = 0x800, scoped, tag = 'input window, operand 2, single buffered']
    #allocation8 [shape = 'u8[8192]{0}', space=vmem, size = 0x2000, scoped, tag = 'output window, operand 0, single buffered']
    %8 = vsyncpa [#allocation3], 0
    %9 = vsyncpa [#allocation6], 0
    %10 = vsyncpa [#allocation4], 0
    // Predicated region
    $region2: #{_bn_parallel_jit.3} parent=1 // pred_check
      _
    $region3: #{_bn_parallel_jit.3} parent=1 // pred_check_branch
      %12 = sbr.rel (0) target = $region5
    $region4: #{_bn_parallel_jit.3} parent=1 // pred_region
      %s14 = ssub.s32 256, 256
      %15 = vsyncadd [#allocation3], %s14
      %s16 = sshll.u32 [#allocation2], 4
      %s17 = int_to_ptr.vmem [resolvable:$true] %s16
      %22 = dma.hbm_to_vmem [thread:$0]  %s0, 256, %s17, [#allocation3], 128, 128, 8
    $region5: #{_bn_parallel_jit.3} parent=1 // pred_fallthru
      _
    // Predicated region
    $region6: #{_bn_parallel_jit.3} parent=1 // pred_check
      _
    $region7: #{_bn_parallel_jit.3} parent=1 // pred_check_branch
      %24 = sbr.rel (0) target = $region9
    $region8: #{_bn_parallel_jit.3} parent=1 // pred_region
      %s26 = ssub.s32 64, 64
      %27 = vsyncadd [#allocation6], %s26
      %s29 = sshll.u32 [#allocation5], 4
      %s30 = int_to_ptr.vmem [resolvable:$true] %s29
      %32 = dma.hbm_to_vmem [thread:$0]  %s1, 64, %s30, [#allocation6]
    $region9: #{_bn_parallel_jit.3} parent=1 // pred_fallthru
      _
    // Predicated region
    $region10: #{_bn_parallel_jit.3} parent=1 // pred_check
      _
    $region11: #{_bn_parallel_jit.3} parent=1 // pred_check_branch
      %34 = sbr.rel (0) target = $region13
    $region12: #{_bn_parallel_jit.3} parent=1 // pred_region
      %s36 = ssub.s32 64, 64
      %37 = vsyncadd [#allocation6], %s36
      %s39 = sshll.u32 [#allocation7], 4
      %s40 = int_to_ptr.vmem [resolvable:$true] %s39
      %42 = dma.hbm_to_vmem [thread:$0]  %s2, 64, %s40, [#allocation6]
    $region13: #{_bn_parallel_jit.3} parent=1 // pred_fallthru
      _
    // Predicated region
    $region14: #{_bn_parallel_jit.3} parent=1 // pred_check
      _
    $region15: #{_bn_parallel_jit.3} parent=1 // pred_check_branch
      %44 = sbr.rel (0) target = $region17
    $region16: #{_bn_parallel_jit.3} parent=1 // pred_region
      %45 = dma.done [#allocation3], 256
    $region17: #{_bn_parallel_jit.3} parent=1 // pred_fallthru
      _
    // Predicated region
    $region18: #{_bn_parallel_jit.3} parent=1 // pred_check
      _
    $region19: #{_bn_parallel_jit.3} parent=1 // pred_check_branch
      %47 = sbr.rel (0) target = $region21
    $region20: #{_bn_parallel_jit.3} parent=1 // pred_region
      %48 = dma.done [#allocation6], 64
    $region21: #{_bn_parallel_jit.3} parent=1 // pred_fallthru
      _
    // Predicated region
    $region22: #{_bn_parallel_jit.3} parent=1 // pred_check
      _
    $region23: #{_bn_parallel_jit.3} parent=1 // pred_check_branch
      %50 = sbr.rel (0) target = $region25
    $region24: #{_bn_parallel_jit.3} parent=1 // pred_region
      %51 = dma.done [#allocation6], 64
    $region25: #{_bn_parallel_jit.3} parent=1 // pred_fallthru
      _
    %v52 = vld [vmem:[#allocation2] sm:$0xff]
    %v53 = vld [vmem:[#allocation2 + $0x8] sm:$0xff]
    %v56 = vcombine.high %v52, %v52
    %v57 = vcombine.high %v53, %v53
    %vm60 = vcmask 1043456
    %v61 = vsel %vm60, %v52, 0.0
    %v62 = vsel %vm60, %v56, 0.0
    %v63 = vadd.f32 %v61, %v62
    %64 = vadd.xlane.f32.xlu0 %v63
    %v65 = vpop.xlane.xlu0 %64
    %v66 = vsel %vm60, %v53, 0.0
    %v67 = vsel %vm60, %v57, 0.0
    %v68 = vadd.f32 %v66, %v67
    %69 = vadd.xlane.f32.xlu0 %v68
    %v70 = vpop.xlane.xlu0 %69
    %v71 = vsel %vm60, %v65, 0.0
    %v72 = vsel %vm60, %v70, 0.0
    %v73 = vadd.f32 %v71, %v72
    %v74 = vmul.f32 %v73, 0.001953125
    %v77 = vunpack.c.l.s4 839922192
    %v78 = vunpack.c.0.s8 %v77
    %v79 = vlaneseq
    %v80 = vshrl.u32 %v79, 7
    %v81 = vsub.s32 %v78, %v80
    %v82 = vrot.slane %v74, %v81
    %v84 = vsub.f32 %v52, %v82
    %v85 = vsub.f32 %v53, %v82
    %v86 = vmul.f32 %v84, %v84
    %v87 = vmul.f32 %v85, %v85
    %v90 = vcombine.high %v86, %v86
    %v91 = vcombine.high %v87, %v87
    %v94 = vsel %vm60, %v86, 0.0
    %v95 = vsel %vm60, %v90, 0.0
    %v96 = vadd.f32 %v94, %v95
    %97 = vadd.xlane.f32.xlu0 %v96
    %v98 = vpop.xlane.xlu0 %97
    %v99 = vsel %vm60, %v87, 0.0
    %v100 = vsel %vm60, %v91, 0.0
    %v101 = vadd.f32 %v99, %v100
    %102 = vadd.xlane.f32.xlu0 %v101
    %v103 = vpop.xlane.xlu0 %102
    %v104 = vsel %vm60, %v98, 0.0
    %v105 = vsel %vm60, %v103, 0.0
    %v106 = vadd.f32 %v104, %v105
    %v107 = vmul.f32 %v106, 0.001953125
    %v108 = vadd.f32 %v107, 1e-05
    %v109 = vrsqrt.pop %v108
    %v110 = vld [vmem:[#allocation5] sm:$0xf]
    %v111 = vmul.f32 %v110, %v109
    %v112 = vld [vmem:[#allocation7] sm:$0xf]
    %v113 = vmul.f32 %v74, %v111
    %v114 = vsub.f32 %v112, %v113
    %116 = vset.pattern.permute.xlu0 0
    %117 = vperm.xlu0 %116, %v111
    %v118 = vpop.permute.xlu0 %117
    %v120 = vunpack.c.l.s4 839922192
    %v121 = vunpack.c.0.s8 %v120
    %v122 = vlaneseq
    %v123 = vshrl.u32 %v122, 7
    %v124 = vsub.s32 %v121, %v123
    %v125 = vrot.slane %v118, %v124
    %v127 = vmul.f32 %v52, %v125
    %v128 = vmul.f32 %v53, %v125
    %130 = vset.pattern.permute.xlu0 0
    %131 = vperm.xlu0 %130, %v114
    %v132 = vpop.permute.xlu0 %131
    %v134 = vunpack.c.l.s4 839922192
    %v135 = vunpack.c.0.s8 %v134
    %v136 = vlaneseq
    %v137 = vshrl.u32 %v136, 7
    %v138 = vsub.s32 %v135, %v137
    %v139 = vrot.slane %v132, %v138
    %v141 = vadd.f32 %v127, %v139
    %v142 = vadd.f32 %v128, %v139
    %143 = vst [vmem:[#allocation8] sm:$0xff] %v141
    %144 = vst [vmem:[#allocation8 + $0x8] sm:$0xff] %v142
    // Predicated region
    $region26: #{_bn_parallel_jit.3} parent=1 // pred_check
      _
    $region27: #{_bn_parallel_jit.3} parent=1 // pred_check_branch
      %146 = sbr.rel (0) target = $region29
    $region28: #{_bn_parallel_jit.3} parent=1 // pred_region
      %s148 = ssub.s32 256, 256
      %149 = vsyncadd [#allocation4], %s148
      %s150 = sshll.u32 [#allocation8], 4
      %s151 = int_to_ptr.vmem [resolvable:$true] %s150
      %156 = dma.vmem_to_hbm [thread:$0]  %s151, 256, %s3, [#allocation4], 128, 128, 8
    $region29: #{_bn_parallel_jit.3} parent=1 // pred_fallthru
      _
    // Predicated region
    $region30: #{_bn_parallel_jit.3} parent=1 // pred_check
      _
    $region31: #{_bn_parallel_jit.3} parent=1 // pred_check_branch
      %158 = sbr.rel (0) target = $region33
    $region32: #{_bn_parallel_jit.3} parent=1 // pred_region
      %159 = dma.done [#allocation4], 256
    $region33: #{_bn_parallel_jit.3} parent=1 // pred_fallthru
      _
    %160 = vsyncpa [#allocation3], 1
    %161 = vsyncpa [#allocation6], 1
    %162 = vsyncpa [#allocation4], 1

</llo_original>
